<compile_context>
chip_gen: v5e
topology: v5e:2x2
jax: 0.10.0
libtpu: 0.0.40
codegen_flags: <defaults>
</compile_context>

<pallas_src>
import math
import functools

import jax
import jax.numpy as jnp
from jax.experimental import pallas as pl
from jax.experimental.pallas import tpu as pltpu

HIDDEN_SIZE = 128
INTERMEDIATE_SIZE = 256
RMS_NORM_EPS = 1e-6
# config: hidden_act='silu', ffn_bias=False  (standard Llama-style FFN)


def _round_up(x, m):
    return ((x + m - 1) // m) * m


def _ffn_kernel(x_ref, nw_ref, wgu_ref, wd_ref, o_ref, *, eps, inter):
    # ---- RMSNorm (f32 math), then cast to the MXU operand dtype ----
    x = x_ref[...].astype(jnp.float32)                         # [tm, H]
    var = jnp.mean(x * x, axis=-1, keepdims=True)               # [tm, 1]
    xn = x * jax.lax.rsqrt(var + eps)
    xn = (nw_ref[...].astype(jnp.float32) * xn).astype(wgu_ref.dtype)

    # ---- fused gate|up projection: one [tm,H] x [H,2I] MXU matmul, f32 acc ----
    gu = jnp.dot(xn, wgu_ref[...], preferred_element_type=jnp.float32)  # [tm, 2I]
    gate = gu[:, :inter]                                        # [tm, I]
    up = gu[:, inter:]                                          # [tm, I]

    # ---- SiLU(gate)*up via tanh form: one EUP transcendental per element,
    #      f32 VPU math (v5e has no bf16 VPU/EUP); one downcast before the MXU.
    h = (0.5 * gate * (1.0 + jnp.tanh(0.5 * gate)) * up).astype(wd_ref.dtype)

    # ---- down projection ----
    out = jnp.dot(h, wd_ref[...], preferred_element_type=jnp.float32)   # [tm, H]
    o_ref[...] = out.astype(o_ref.dtype)


def prepare_ffn_params(norm_weight, wg, wu, wd, matmul_dtype=jnp.bfloat16):
    """One-time parameter prep (hoisted out of the forward hot path).

    Fuses gate+up into a single [H, 2I] weight (halves MXU weight pushes) and
    casts the MXU operands to `matmul_dtype` (bf16 by default: native MXU dtype
    on v5e/v6e/v7x, halves weight DMA/VMEM).  Pass matmul_dtype=None to keep
    full input precision (exact match to the PyTorch f32 reference).
    """
    wgu = jnp.concatenate([wg, wu], axis=1)      # [H, 2I]
    if matmul_dtype is not None:
        wgu = wgu.astype(matmul_dtype)
        wd = wd.astype(matmul_dtype)
    return norm_weight.reshape(1, -1), wgu, wd


def llama4_ffn(hidden_states, nw2d, wgu, wd, *, eps=RMS_NORM_EPS, tm=None):
    """hidden_states: [B, S, H]; nw2d: [1, H]; wgu: [H, 2I]; wd: [I, H]."""
    B, S, H = hidden_states.shape
    I = wd.shape[0]
    assert wgu.shape == (H, 2 * I)
    M = B * S
    x2d = hidden_states.reshape(M, H)

    w_itemsize = wgu.dtype.itemsize
    # bf16 packs two rows per sublane -> 16-row alignment; 32 for 8-bit dtypes.
    align = 16 if w_itemsize == 2 else (32 if w_itemsize == 1 else 8)

    if tm is None:
        # Large token tiles amortize the ~0.35 us per-grid-step overhead.
        tm = min(2048, _round_up(M, align))
        # Keep >= 2 grid steps when there is enough work so the 'parallel'
        # axis can be sharded across v7x's two TensorCores.
        if M >= 512:
            tm = min(tm, _round_up(-(-M // 2), align))
    tm = max(align, _round_up(tm, align))

    # Pad M up to a tile multiple (zero rows are harmless: var=0 -> rsqrt(eps)
    # is finite; padded outputs are sliced off below).
    M_pad = _round_up(M, tm)
    if M_pad != M:
        x2d = jnp.pad(x2d, ((0, M_pad - M), (0, 0)))

    grid = (M_pad // tm,)
    kernel = functools.partial(_ffn_kernel, eps=eps, inter=I)

    # Explicit VMEM budget: double-buffered x/out tiles + single-buffered
    # weights + f32 intermediates, with 2x headroom, clamped to a limit that is
    # safe on v5e (16 MiB default scoped) and v7x (64 MiB physical per TC).
    x_bytes = x2d.dtype.itemsize
    o_bytes = hidden_states.dtype.itemsize
    est = (2 * tm * H * x_bytes                       # x tile, double-buffered
           + 2 * tm * H * o_bytes                     # out tile, double-buffered
           + (H * 2 * I + I * H) * w_itemsize         # weights, single-buffered
           + H * nw2d.dtype.itemsize
           + tm * 2 * I * 4                           # f32 gu intermediate
           + tm * H * 4 + 2 * tm * I * w_itemsize)    # xn / h temporaries
    vmem_limit = int(min(max(2 * est, 32 * 1024 * 1024), 48 * 1024 * 1024))

    # Advisory cost estimate for the XLA scheduler.
    flops = 6 * M_pad * H * I                         # gate+up (4MHI) + down (2MHI)
    bytes_accessed = (M_pad * H * (x_bytes + o_bytes)
                      + wgu.size * w_itemsize
                      + wd.size * w_itemsize
                      + nw2d.size * nw2d.dtype.itemsize)
    cost = pl.CostEstimate(flops=flops,
                           transcendentals=M_pad * I,   # one tanh per element
                           bytes_accessed=bytes_accessed)

    # Weights have constant index maps -> DMA'd once and kept resident; with
    # pl.Buffered(1) they are single-buffered (no useless second VMEM copy).
    # TODO(synk): for production Llama4 sizes (H~5120, I~8192) the resident
    # [H,2I]/[I,H] weights exceed v7x's 64 MiB VMEM; add a grid axis over I
    # with a pl.when-initialized f32 accumulator and single-buffered weight
    # slices instead of keeping whole weights resident.
    out2d = pl.pallas_call(
        kernel,
        out_shape=jax.ShapeDtypeStruct((M_pad, H), hidden_states.dtype),
        grid_spec=pltpu.PrefetchScalarGridSpec(
            num_scalar_prefetch=0,
            grid=grid,
            in_specs=[
                pl.BlockSpec((tm, H), lambda i: (i, 0)),            # x tile
                pl.BlockSpec((1, H), lambda i: (0, 0),
                             pipeline_mode=pl.Buffered(1)),         # rmsnorm w
                pl.BlockSpec((H, 2 * I), lambda i: (0, 0),
                             pipeline_mode=pl.Buffered(1)),         # [gate|up] w
                pl.BlockSpec((I, H), lambda i: (0, 0),
                             pipeline_mode=pl.Buffered(1)),         # down w
            ],
            out_specs=pl.BlockSpec((tm, H), lambda i: (i, 0)),
        ),
        compiler_params=pltpu.CompilerParams(
            dimension_semantics=("parallel",),
            vmem_limit_bytes=vmem_limit),
        cost_estimate=cost,
    )(x2d, nw2d, wgu, wd)

    if M_pad != M:
        out2d = out2d[:M]
    return out2d.reshape(B, S, H)


def _reference(hidden_states, norm_weight, wg, wu, wd, eps=RMS_NORM_EPS,
               matmul_dtype=None):
    """Pure-JAX reference mirroring the PyTorch module; if matmul_dtype is set,
    it mirrors the same operand-cast points as the kernel's production path."""
    x = hidden_states.astype(jnp.float32)
    var = jnp.mean(x * x, axis=-1, keepdims=True)
    xn = norm_weight.astype(jnp.float32) * (x * jax.lax.rsqrt(var + eps))
    md = matmul_dtype if matmul_dtype is not None else hidden_states.dtype
    xn = xn.astype(md).astype(jnp.float32)
    wg32 = wg.astype(md).astype(jnp.float32)
    wu32 = wu.astype(md).astype(jnp.float32)
    wd32 = wd.astype(md).astype(jnp.float32)
    gate = xn @ wg32
    up = xn @ wu32
    h = (gate * jax.nn.sigmoid(gate) * up).astype(md).astype(jnp.float32)
    return (h @ wd32).astype(hidden_states.dtype)


if __name__ == "__main__":
    key = jax.random.PRNGKey(0)
    B, S, H, I = 2, 8, HIDDEN_SIZE, INTERMEDIATE_SIZE
    k_x, k_g, k_u, k_d, k_x2 = jax.random.split(key, 5)

    x = jax.random.normal(k_x, (B, S, H), dtype=jnp.float32)

    # Deterministic parameter init mimicking nn.Linear's kaiming-uniform bound.
    bound_h = 1.0 / math.sqrt(H)
    bound_i = 1.0 / math.sqrt(I)
    # PyTorch nn.Linear weight is [out, in]; stored transposed [in, out] for y = x @ W.T
    wg = jax.random.uniform(k_g, (H, I), minval=-bound_h, maxval=bound_h, dtype=jnp.float32)
    wu = jax.random.uniform(k_u, (H, I), minval=-bound_h, maxval=bound_h, dtype=jnp.float32)
    wd = jax.random.uniform(k_d, (I, H), minval=-bound_i, maxval=bound_i, dtype=jnp.float32)
    norm_weight = jnp.ones((H,), dtype=jnp.float32)  # SimplifiedRMSNorm initializes to ones

    # ---- production path: bf16 MXU operands, f32 accumulation ----
    nw2d, wgu_bf, wd_bf = prepare_ffn_params(norm_weight, wg, wu, wd,
                                             matmul_dtype=jnp.bfloat16)
    out = jax.block_until_ready(llama4_ffn(x, nw2d, wgu_bf, wd_bf))
    ref_bf = _reference(x, norm_weight, wg, wu, wd, matmul_dtype=jnp.bfloat16)
    assert out.shape == (B, S, H)
    assert jnp.allclose(out, ref_bf, atol=2e-3, rtol=2e-3), "mismatch (bf16 path)"

    # ---- strict-precision path: f32 MXU operands, tight match to the spec ----
    nw2d32, wgu32, wd32 = prepare_ffn_params(norm_weight, wg, wu, wd,
                                             matmul_dtype=None)
    out32 = jax.block_until_ready(llama4_ffn(x, nw2d32, wgu32, wd32))
    ref32 = _reference(x, norm_weight, wg, wu, wd, matmul_dtype=None)
    assert jnp.allclose(out32, ref32, atol=1e-4, rtol=1e-4), "mismatch (f32 path)"

    # ---- padding / multi-step grid path (token count not a tile multiple) ----
    B2, S2 = 3, 37
    x2 = jax.random.normal(k_x2, (B2, S2, H), dtype=jnp.float32)
    out2 = jax.block_until_ready(llama4_ffn(x2, nw2d, wgu_bf, wd_bf, tm=48))
    ref2 = _reference(x2, norm_weight, wg, wu, wd, matmul_dtype=jnp.bfloat16)
    assert out2.shape == (B2, S2, H)
    assert jnp.allclose(out2, ref2, atol=2e-3, rtol=2e-3), "mismatch (padded path)"

    print("KERNEL_OK")
</pallas_src>

<mosaic_0001>
module attributes {stable_mosaic.version = 11 : i64} {
  func.func @_ffn_kernel(%arg0: i32, %arg1: memref<16x128xf32, #tpu.memory_space<vmem>>, %arg2: memref<1x128xf32, #tpu.memory_space<vmem>>, %arg3: memref<128x512xbf16, #tpu.memory_space<vmem>>, %arg4: memref<256x128xbf16, #tpu.memory_space<vmem>>, %arg5: memref<16x128xf32, #tpu.memory_space<vmem>>) attributes {dimension_semantics = [#tpu.dimension_semantics<parallel>], iteration_bounds = array<i64: 1>, scalar_prefetch = 0 : i64, scratch_operands = 0 : i64, tpu.core_type = #tpu.core_type<tc>, window_params = [{transform_indices = @transform_0, window_bounds = array<i64: 16, 128>}, {pipeline_mode = #tpu.pipeline_mode<synchronous>, transform_indices = @transform_1, window_bounds = array<i64: 1, 128>}, {pipeline_mode = #tpu.pipeline_mode<synchronous>, transform_indices = @transform_2, window_bounds = array<i64: 128, 512>}, {pipeline_mode = #tpu.pipeline_mode<synchronous>, transform_indices = @transform_3, window_bounds = array<i64: 256, 128>}, {transform_indices = @transform_4, window_bounds = array<i64: 16, 128>}]} {
    %c0 = arith.constant 0 : index
    %c0_0 = arith.constant 0 : index
    %0 = vector.load %arg1[%c0, %c0_0] : memref<16x128xf32, #tpu.memory_space<vmem>>, vector<16x128xf32>
    %1 = arith.mulf %0, %0 : vector<16x128xf32>
    %cst = arith.constant dense<0.000000e+00> : vector<16xf32>
    %2 = vector.multi_reduction <add>, %1, %cst [1] : vector<16x128xf32> to vector<16xf32>
    %3 = vector.shape_cast %2 : vector<16xf32> to vector<16x1xf32>
    %cst_1 = arith.constant 1.280000e+02 : f32
    %4 = vector.broadcast %cst_1 : f32 to vector<16x1xf32>
    %5 = arith.divf %3, %4 : vector<16x1xf32>
    %cst_2 = arith.constant 9.99999997E-7 : f32
    %6 = vector.broadcast %cst_2 : f32 to vector<16x1xf32>
    %7 = arith.addf %5, %6 : vector<16x1xf32>
    %8 = math.rsqrt %7 : vector<16x1xf32>
    %9 = vector.broadcast %8 : vector<16x1xf32> to vector<16x128xf32>
    %10 = arith.mulf %0, %9 : vector<16x128xf32>
    %c0_3 = arith.constant 0 : index
    %c0_4 = arith.constant 0 : index
    %11 = vector.load %arg2[%c0_3, %c0_4] : memref<1x128xf32, #tpu.memory_space<vmem>>, vector<1x128xf32>
    %12 = vector.broadcast %11 : vector<1x128xf32> to vector<16x128xf32>
    %13 = arith.mulf %12, %10 : vector<16x128xf32>
    %14 = arith.truncf %13 : vector<16x128xf32> to vector<16x128xbf16>
    %c0_5 = arith.constant 0 : index
    %c0_6 = arith.constant 0 : index
    %15 = vector.load %arg3[%c0_5, %c0_6] : memref<128x512xbf16, #tpu.memory_space<vmem>>, vector<128x512xbf16>
    %cst_7 = arith.constant dense<0.000000e+00> : vector<16x512xf32>
    %16 = tpu.matmul %14, %15, %cst_7 {dimension_numbers = #tpu.dot_dimension_numbers<[1], [0], [0], [1], [0, 0, 1, 1], [], []>} : vector<16x128xbf16>, vector<128x512xbf16>, vector<16x512xf32> -> vector<16x512xf32>
    %17 = vector.extract_strided_slice %16 {offsets = [0, 0], sizes = [16, 256], strides = [1, 1]} : vector<16x512xf32> to vector<16x256xf32>
    %18 = vector.extract_strided_slice %16 {offsets = [0, 256], sizes = [16, 256], strides = [1, 1]} : vector<16x512xf32> to vector<16x256xf32>
    %cst_8 = arith.constant 5.000000e-01 : f32
    %19 = vector.broadcast %cst_8 : f32 to vector<16x256xf32>
    %20 = arith.mulf %19, %17 : vector<16x256xf32>
    %cst_9 = arith.constant 5.000000e-01 : f32
    %21 = vector.broadcast %cst_9 : f32 to vector<16x256xf32>
    %22 = arith.mulf %21, %17 : vector<16x256xf32>
    %23 = math.tanh %22 : vector<16x256xf32>
    %cst_10 = arith.constant 1.000000e+00 : f32
    %24 = vector.broadcast %cst_10 : f32 to vector<16x256xf32>
    %25 = arith.addf %24, %23 : vector<16x256xf32>
    %26 = arith.mulf %20, %25 : vector<16x256xf32>
    %27 = arith.mulf %26, %18 : vector<16x256xf32>
    %28 = arith.truncf %27 : vector<16x256xf32> to vector<16x256xbf16>
    %c0_11 = arith.constant 0 : index
    %c0_12 = arith.constant 0 : index
    %29 = vector.load %arg4[%c0_11, %c0_12] : memref<256x128xbf16, #tpu.memory_space<vmem>>, vector<256x128xbf16>
    %cst_13 = arith.constant dense<0.000000e+00> : vector<16x128xf32>
    %30 = tpu.matmul %28, %29, %cst_13 {dimension_numbers = #tpu.dot_dimension_numbers<[1], [0], [0], [1], [0, 0, 1, 1], [], []>} : vector<16x256xbf16>, vector<256x128xbf16>, vector<16x128xf32> -> vector<16x128xf32>
    %c0_14 = arith.constant 0 : index
    %c0_15 = arith.constant 0 : index
    %31 = vector.load %arg5[%c0_14, %c0_15] : memref<16x128xf32, #tpu.memory_space<vmem>>, vector<16x128xf32>
    tpu.vector_store %arg5[%c0_14, %c0_15], %30 {strides = array<i32>} : memref<16x128xf32, #tpu.memory_space<vmem>>, vector<16x128xf32>,
    return
  }
  func.func @transform_0(%arg0: i32) -> (i32, i32) {
    %c0_i32 = arith.constant 0 : i32
    %c0_i32_0 = arith.constant 0 : i32
    return %arg0, %c0_i32 : i32, i32
  }
  func.func @transform_1(%arg0: i32) -> (i32, i32) {
    %c0_i32 = arith.constant 0 : i32
    %c0_i32_0 = arith.constant 0 : i32
    %c0_i32_1 = arith.constant 0 : i32
    return %c0_i32, %c0_i32_0 : i32, i32
  }
  func.func @transform_2(%arg0: i32) -> (i32, i32) {
    %c0_i32 = arith.constant 0 : i32
    %c0_i32_0 = arith.constant 0 : i32
    %c0_i32_1 = arith.constant 0 : i32
    return %c0_i32, %c0_i32_0 : i32, i32
  }
  func.func @transform_3(%arg0: i32) -> (i32, i32) {
    %c0_i32 = arith.constant 0 : i32
    %c0_i32_0 = arith.constant 0 : i32
    %c0_i32_1 = arith.constant 0 : i32
    return %c0_i32, %c0_i32_0 : i32, i32
  }
  func.func @transform_4(%arg0: i32) -> (i32, i32) {
    %c0_i32 = arith.constant 0 : i32
    %c0_i32_0 = arith.constant 0 : i32
    return %arg0, %c0_i32 : i32, i32
  }
}

</mosaic_0001>

<llo_original>
// kernel: tpu_custom_call.1
$region0: #{tpu_custom_call.1}
  #allocation0 [shape = 'u32[]', space=smem, size = 0x4, offset = 0x4, fixed_abs, tag = 'smem constant byte address 0x4 - core index']
  #allocation1 [shape = 'u32[72,128]{1,0:T(1,128)}', space=vmem, size = 0x9000, scoped, tag = 'internal scratch']
  %s0 = inlined_call_operand.hbm [shape: f32[16,128], index: 0, kind: input, shape index: {}]
  %s1 = inlined_call_operand.hbm [shape: f32[1,128], index: 1, kind: input, shape index: {}]
  %s2 = inlined_call_operand.hbm [shape: bf16[128,512], index: 2, kind: input, shape index: {}]
  %s3 = inlined_call_operand.hbm [shape: bf16[256,128], index: 3, kind: input, shape index: {}]
  %s4 = inlined_call_operand.hbm [shape: f32[16,128], index: 4, kind: output, shape index: {}]
  %s5 = sld [smem:[#allocation0]]
  $region42: #{tpu_custom_call.1} parent=0
    _
  %s7 = ssub.s32 1, %s5
  %s8 = scalar_select 0, %s7, %s5
  $region1: #{tpu_custom_call.1} parent=0
    #allocation2 [shape = 'u8[8192]{0}', space=vmem, size = 0x2000, scoped, tag = 'input window, operand 0, single buffered']
    #allocation3 [shape = 's32[1]{0}', space=sflag, size = 0x4, scoped, tag = 'scoped memory for tpu_custom_call.1']
    #allocation4 [shape = 's32[1]{0}', space=sflag, size = 0x4, scoped, tag = 'scoped memory for tpu_custom_call.1']
    #allocation5 [shape = 'u8[512]{0}', space=vmem, size = 0x400, scoped, tag = 'input window, operand 1, single buffered']
    #allocation6 [shape = 's32[1]{0}', space=sflag, size = 0x4, scoped, tag = 'scoped memory for tpu_custom_call.1']
    #allocation7 [shape = 'u8[131072]{0}', space=vmem, size = 0x20000, scoped, tag = 'input window, operand 2, single buffered']
    #allocation8 [shape = 'u8[65536]{0}', space=vmem, size = 0x10000, scoped, tag = 'input window, operand 3, single buffered']
    #allocation9 [shape = 's32[1]{0}', space=sflag, size = 0x4, scoped, tag = 'scoped memory for tpu_custom_call.1']
    #allocation10 [shape = 'u8[8192]{0}', space=vmem, size = 0x2000, scoped, tag = 'output window, operand 0, single buffered']
    %9 = vsyncpa [#allocation3], 0
    %10 = vsyncpa [#allocation6], 0
    %11 = vsyncpa [#allocation9], 0
    %12 = vsyncpa [#allocation4], 0
    // Predicated region
    $region2: #{tpu_custom_call.1} parent=1 // pred_check
      _
    $region3: #{tpu_custom_call.1} parent=1 // pred_check_branch
      %14 = sbr.rel (0) target = $region5
    $region4: #{tpu_custom_call.1} parent=1 // pred_region
      %16 = vsyncadd [#allocation3], 0
      %s17 = sshll.u32 %s0, 4
      %s18 = int_to_ptr.hbm [resolvable:$true] %s17
      %s19 = sshll.u32 [#allocation2], 4
      %s20 = int_to_ptr.vmem [resolvable:$true] %s19
      %25 = dma.hbm_to_vmem [thread:$0]  %s18, 256, %s20, [#allocation3], 128, 128, 8
    $region5: #{tpu_custom_call.1} parent=1 // pred_fallthru
      _
    // Predicated region
    $region6: #{tpu_custom_call.1} parent=1 // pred_check
      _
    $region7: #{tpu_custom_call.1} parent=1 // pred_check_branch
      %27 = sbr.rel (0) target = $region9
    $region8: #{tpu_custom_call.1} parent=1 // pred_region
      %29 = vsyncadd [#allocation6], 0
      %s31 = sshll.u32 %s1, 4
      %s32 = int_to_ptr.hbm [resolvable:$true] %s31
      %s33 = sshll.u32 [#allocation5], 4
      %s34 = int_to_ptr.vmem [resolvable:$true] %s33
      %36 = dma.hbm_to_vmem [thread:$0]  %s32, 16, %s34, [#allocation6]
    $region9: #{tpu_custom_call.1} parent=1 // pred_fallthru
      _
    // Predicated region
    $region10: #{tpu_custom_call.1} parent=1 // pred_check
      _
    $region11: #{tpu_custom_call.1} parent=1 // pred_check_branch
      %38 = sbr.rel (0) target = $region13
    $region12: #{tpu_custom_call.1} parent=1 // pred_region
      %40 = vsyncadd [#allocation6], 0
      %s41 = sshll.u32 %s2, 4
      %s42 = int_to_ptr.hbm [resolvable:$true] %s41
      %s43 = sshll.u32 [#allocation7], 4
      %s44 = int_to_ptr.vmem [resolvable:$true] %s43
      %49 = dma.hbm_to_vmem [thread:$0]  %s42, 4096, %s44, [#allocation6], 256, 256, 16
    $region13: #{tpu_custom_call.1} parent=1 // pred_fallthru
      _
    // Predicated region
    $region14: #{tpu_custom_call.1} parent=1 // pred_check
      _
    $region15: #{tpu_custom_call.1} parent=1 // pred_check_branch
      %51 = sbr.rel (0) target = $region17
    $region16: #{tpu_custom_call.1} parent=1 // pred_region
      %53 = vsyncadd [#allocation9], 0
      %s54 = sshll.u32 %s3, 4
      %s55 = int_to_ptr.hbm [resolvable:$true] %s54
      %s56 = sshll.u32 [#allocation8], 4
      %s57 = int_to_ptr.vmem [resolvable:$true] %s56
      %62 = dma.hbm_to_vmem [thread:$0]  %s55, 2048, %s57, [#allocation9], 64, 64, 4
    $region17: #{tpu_custom_call.1} parent=1 // pred_fallthru
      _
    // Predicated region
    $region18: #{tpu_custom_call.1} parent=1 // pred_check
      _
    $region19: #{tpu_custom_call.1} parent=1 // pred_check_branch
      %64 = sbr.rel (0) target = $region21
    $region20: #{tpu_custom_call.1} parent=1 // pred_region
      %66 = dma.done [#allocation3], 256
    $region21: #{tpu_custom_call.1} parent=1 // pred_fallthru
      _
    // Predicated region
    $region22: #{tpu_custom_call.1} parent=1 // pred_check
      _
    $region23: #{tpu_custom_call.1} parent=1 // pred_check_branch
      %68 = sbr.rel (0) target = $region25
    $region24: #{tpu_custom_call.1} parent=1 // pred_region
      %70 = dma.done [#allocation6], 16
    $region25: #{tpu_custom_call.1} parent=1 // pred_fallthru
      _
    // Predicated region
    $region26: #{tpu_custom_call.1} parent=1 // pred_check
      _
    $region27: #{tpu_custom_call.1} parent=1 // pred_check_branch
      %72 = sbr.rel (0) target = $region29
    $region28: #{tpu_custom_call.1} parent=1 // pred_region
      %74 = dma.done [#allocation6], 4096
    $region29: #{tpu_custom_call.1} parent=1 // pred_fallthru
      _
    // Predicated region
    $region30: #{tpu_custom_call.1} parent=1 // pred_check
      _
    $region31: #{tpu_custom_call.1} parent=1 // pred_check_branch
      %76 = sbr.rel (0) target = $region33
    $region32: #{tpu_custom_call.1} parent=1 // pred_region
      %78 = dma.done [#allocation9], 2048
    $region33: #{tpu_custom_call.1} parent=1 // pred_fallthru
      _
    %v79 = vld [vmem:[#allocation2] sm:$0xff]
    %v80 = vld [vmem:[#allocation2 + $0x8] sm:$0xff]
    %v81 = vmul.f32 %v79, %v79
    %v82 = vmul.f32 %v80, %v80
    %83 = vadd.xlane.f32.xlu0 %v81
    %v84 = vpop.xlane.xlu0 %83
    %85 = vadd.xlane.f32.xlu0 %v82
    %v86 = vpop.xlane.xlu0 %85
    %v87 = vrcp.pop 128.0
    %v88 = vmul.f32 128.0, %v87
    %v89 = vsub.f32 1.0, %v88
    %v90 = vmul.f32 %v87, %v89
    %v91 = vadd.f32 %v87, %v90
    %vm92 = vweird.f32 %v87
    %v93 = vsel %vm92, %v87, %v91
    %v94 = vmul.f32 %v84, %v93
    %v95 = vmul.f32 %v86, %v93
    %v96 = vadd.f32 %v94, 1e-06
    %v97 = vadd.f32 %v95, 1e-06
    %v98 = vrsqrt.pop %v96
    %v99 = vmul.f32 %v98, %v96
    %v100 = vmul.f32 %v99, %v98
    %v101 = vmul.f32 0.5, %v100
    %v102 = vsub.f32 1.5, %v101
    %v103 = vmul.f32 %v98, %v102
    %vm104 = vweird.f32 %v96
    %vm105 = vweird.f32 %v98
    %vm106 = vmor %vm104, %vm105
    %v107 = vsel %vm106, %v98, %v103
    %v108 = vrsqrt.pop %v97
    %v109 = vmul.f32 %v108, %v97
    %v110 = vmul.f32 %v109, %v108
    %v111 = vmul.f32 0.5, %v110
    %v112 = vsub.f32 1.5, %v111
    %v113 = vmul.f32 %v108, %v112
    %vm114 = vweird.f32 %v97
    %vm115 = vweird.f32 %v108
    %vm116 = vmor %vm114, %vm115
    %v117 = vsel %vm116, %v108, %v113
    %v118 = vmul.f32 %v79, %v107
    %v119 = vmul.f32 %v80, %v117
    %v120 = vld [vmem:[#allocation5] sm:$0x1]
    %v122 = vperm.slane %v120, 0
    %v124 = vmul.f32 %v122, %v118
    %v125 = vmul.f32 %v122, %v119
    %v126 = vpack.c.bf16 %v125, %v124
    %v127 = vld [vmem:[#allocation7] sm:$0xff]
    %v128 = vld [vmem:[#allocation7 + $0x8] sm:$0xff]
    %v129 = vld [vmem:[#allocation7 + $0x10] sm:$0xff]
    %v130 = vld [vmem:[#allocation7 + $0x18] sm:$0xff]
    %v131 = vld [vmem:[#allocation7 + $0x20] sm:$0xff]
    %v132 = vld [vmem:[#allocation7 + $0x28] sm:$0xff]
    %v133 = vld [vmem:[#allocation7 + $0x30] sm:$0xff]
    %v134 = vld [vmem:[#allocation7 + $0x38] sm:$0xff]
    %v135 = vld [vmem:[#allocation7 + $0x40] sm:$0xff]
    %v136 = vld [vmem:[#allocation7 + $0x48] sm:$0xff]
    %v137 = vld [vmem:[#allocation7 + $0x50] sm:$0xff]
    %v138 = vld [vmem:[#allocation7 + $0x58] sm:$0xff]
    %v139 = vld [vmem:[#allocation7 + $0x60] sm:$0xff]
    %v140 = vld [vmem:[#allocation7 + $0x68] sm:$0xff]
    %v141 = vld [vmem:[#allocation7 + $0x70] sm:$0xff]
    %v142 = vld [vmem:[#allocation7 + $0x78] sm:$0xff]
    %v143 = vld [vmem:[#allocation7 + $0x80] sm:$0xff]
    %v144 = vld [vmem:[#allocation7 + $0x88] sm:$0xff]
    %v145 = vld [vmem:[#allocation7 + $0x90] sm:$0xff]
    %v146 = vld [vmem:[#allocation7 + $0x98] sm:$0xff]
    %v147 = vld [vmem:[#allocation7 + $0xa0] sm:$0xff]
    %v148 = vld [vmem:[#allocation7 + $0xa8] sm:$0xff]
    %v149 = vld [vmem:[#allocation7 + $0xb0] sm:$0xff]
    %v150 = vld [vmem:[#allocation7 + $0xb8] sm:$0xff]
    %v151 = vld [vmem:[#allocation7 + $0xc0] sm:$0xff]
    %v152 = vld [vmem:[#allocation7 + $0xc8] sm:$0xff]
    %v153 = vld [vmem:[#allocation7 + $0xd0] sm:$0xff]
    %v154 = vld [vmem:[#allocation7 + $0xd8] sm:$0xff]
    %v155 = vld [vmem:[#allocation7 + $0xe0] sm:$0xff]
    %v156 = vld [vmem:[#allocation7 + $0xe8] sm:$0xff]
    %v157 = vld [vmem:[#allocation7 + $0xf0] sm:$0xff]
    %v158 = vld [vmem:[#allocation7 + $0xf8] sm:$0xff]
    %v191 = vunpack.c.l.b16 %v127
    %v192 = vunpack.c.h.b16 %v127
    %v193 = vunpack.c.l.b16 %v128
    %v194 = vunpack.c.h.b16 %v128
    %v195 = vunpack.c.l.b16 %v129
    %v196 = vunpack.c.h.b16 %v129
    %v197 = vunpack.c.l.b16 %v130
    %v198 = vunpack.c.h.b16 %v130
    %v199 = vunpack.c.l.b16 %v131
    %v200 = vunpack.c.h.b16 %v131
    %v201 = vunpack.c.l.b16 %v132
    %v202 = vunpack.c.h.b16 %v132
    %v203 = vunpack.c.l.b16 %v133
    %v204 = vunpack.c.h.b16 %v133
    %v205 = vunpack.c.l.b16 %v134
    %v206 = vunpack.c.h.b16 %v134
    %v207 = vunpack.c.l.b16 %v135
    %v208 = vunpack.c.h.b16 %v135
    %v209 = vunpack.c.l.b16 %v136
    %v210 = vunpack.c.h.b16 %v136
    %v211 = vunpack.c.l.b16 %v137
    %v212 = vunpack.c.h.b16 %v137
    %v213 = vunpack.c.l.b16 %v138
    %v214 = vunpack.c.h.b16 %v138
    %v215 = vunpack.c.l.b16 %v139
    %v216 = vunpack.c.h.b16 %v139
    %v217 = vunpack.c.l.b16 %v140
    %v218 = vunpack.c.h.b16 %v140
    %v219 = vunpack.c.l.b16 %v141
    %v220 = vunpack.c.h.b16 %v141
    %v221 = vunpack.c.l.b16 %v142
    %v222 = vunpack.c.h.b16 %v142
    %v223 = vunpack.c.l.b16 %v143
    %v224 = vunpack.c.h.b16 %v143
    %v225 = vunpack.c.l.b16 %v144
    %v226 = vunpack.c.h.b16 %v144
    %v227 = vunpack.c.l.b16 %v145
    %v228 = vunpack.c.h.b16 %v145
    %v229 = vunpack.c.l.b16 %v146
    %v230 = vunpack.c.h.b16 %v146
    %v231 = vunpack.c.l.b16 %v147
    %v232 = vunpack.c.h.b16 %v147
    %v233 = vunpack.c.l.b16 %v148
    %v234 = vunpack.c.h.b16 %v148
    %v235 = vunpack.c.l.b16 %v149
    %v236 = vunpack.c.h.b16 %v149
    %v237 = vunpack.c.l.b16 %v150
    %v238 = vunpack.c.h.b16 %v150
    %v239 = vunpack.c.l.b16 %v151
    %v240 = vunpack.c.h.b16 %v151
    %v241 = vunpack.c.l.b16 %v152
    %v242 = vunpack.c.h.b16 %v152
    %v243 = vunpack.c.l.b16 %v153
    %v244 = vunpack.c.h.b16 %v153
    %v245 = vunpack.c.l.b16 %v154
    %v246 = vunpack.c.h.b16 %v154
    %v247 = vunpack.c.l.b16 %v155
    %v248 = vunpack.c.h.b16 %v155
    %v249 = vunpack.c.l.b16 %v156
    %v250 = vunpack.c.h.b16 %v156
    %v251 = vunpack.c.l.b16 %v157
    %v252 = vunpack.c.h.b16 %v157
    %v253 = vunpack.c.l.b16 %v158
    %v254 = vunpack.c.h.b16 %v158
    %v255 = vpack.c.b16 %v195, %v191
    %v256 = vpack.c.b16 %v196, %v192
    %v257 = vpack.c.b16 %v197, %v193
    %v258 = vpack.c.b16 %v198, %v194
    %v259 = vpack.c.b16 %v203, %v199
    %v260 = vpack.c.b16 %v204, %v200
    %v261 = vpack.c.b16 %v205, %v201
    %v262 = vpack.c.b16 %v206, %v202
    %v263 = vpack.c.b16 %v211, %v207
    %v264 = vpack.c.b16 %v212, %v208
    %v265 = vpack.c.b16 %v213, %v209
    %v266 = vpack.c.b16 %v214, %v210
    %v267 = vpack.c.b16 %v219, %v215
    %v268 = vpack.c.b16 %v220, %v216
    %v269 = vpack.c.b16 %v221, %v217
    %v270 = vpack.c.b16 %v222, %v218
    %v271 = vpack.c.b16 %v227, %v223
    %v272 = vpack.c.b16 %v228, %v224
    %v273 = vpack.c.b16 %v229, %v225
    %v274 = vpack.c.b16 %v230, %v226
    %v275 = vpack.c.b16 %v235, %v231
    %v276 = vpack.c.b16 %v236, %v232
    %v277 = vpack.c.b16 %v237, %v233
    %v278 = vpack.c.b16 %v238, %v234
    %v279 = vpack.c.b16 %v243, %v239
    %v280 = vpack.c.b16 %v244, %v240
    %v281 = vpack.c.b16 %v245, %v241
    %v282 = vpack.c.b16 %v246, %v242
    %v283 = vpack.c.b16 %v251, %v247
    %v284 = vpack.c.b16 %v252, %v248
    %v285 = vpack.c.b16 %v253, %v249
    %v286 = vpack.c.b16 %v254, %v250
    %319 = vmatpush.bf16.msra.mxu0 %v283
    %320 = vmatpush.bf16.msra.mxu0 %v279
    %321 = vmatpush.bf16.msra.mxu0 %v275
    %322 = vmatpush.bf16.msra.mxu0 %v271
    %323 = vmatpush.bf16.msra.mxu0 %v267
    %324 = vmatpush.bf16.msra.mxu0 %v263
    %325 = vmatpush.bf16.msra.mxu0 %v259
    %326 = vmatpush.bf16.msra.mxu0 %v255
    %327 = vmatmul.bf16.gmra.mxu0 %v126
    %v328 = vpop.f32.mrf.mxu0
    %v329 = vadd.f32 0.0, %v328
    %v330 = vpop.f32.mrf.mxu0
    %v331 = vadd.f32 0.0, %v330
    %332 = vdwg.mxu0
    %333 = vmatpush.bf16.msra.mxu0 %v284
    %334 = vmatpush.bf16.msra.mxu0 %v280
    %335 = vmatpush.bf16.msra.mxu0 %v276
    %336 = vmatpush.bf16.msra.mxu0 %v272
    %337 = vmatpush.bf16.msra.mxu0 %v268
    %338 = vmatpush.bf16.msra.mxu0 %v264
    %339 = vmatpush.bf16.msra.mxu0 %v260
    %340 = vmatpush.bf16.msra.mxu0 %v256
    %341 = vmatmul.bf16.gmra.mxu0 %v126
    %v342 = vpop.f32.mrf.mxu0
    %v343 = vadd.f32 0.0, %v342
    %v344 = vpop.f32.mrf.mxu0
    %v345 = vadd.f32 0.0, %v344
    %346 = vdwg.mxu0
    %347 = vmatpush.bf16.msra.mxu0 %v285
    %348 = vmatpush.bf16.msra.mxu0 %v281
    %349 = vmatpush.bf16.msra.mxu0 %v277
    %350 = vmatpush.bf16.msra.mxu0 %v273
    %351 = vmatpush.bf16.msra.mxu0 %v269
    %352 = vmatpush.bf16.msra.mxu0 %v265
    %353 = vmatpush.bf16.msra.mxu0 %v261
    %354 = vmatpush.bf16.msra.mxu0 %v257
    %355 = vmatmul.bf16.gmra.mxu0 %v126
    %v356 = vpop.f32.mrf.mxu0
    %v357 = vadd.f32 0.0, %v356
    %v358 = vpop.f32.mrf.mxu0
    %v359 = vadd.f32 0.0, %v358
    %360 = vdwg.mxu0
    %361 = vmatpush.bf16.msra.mxu0 %v286
    %362 = vmatpush.bf16.msra.mxu0 %v282
    %363 = vmatpush.bf16.msra.mxu0 %v278
    %364 = vmatpush.bf16.msra.mxu0 %v274
    %365 = vmatpush.bf16.msra.mxu0 %v270
    %366 = vmatpush.bf16.msra.mxu0 %v266
    %367 = vmatpush.bf16.msra.mxu0 %v262
    %368 = vmatpush.bf16.msra.mxu0 %v258
    %369 = vmatmul.bf16.gmra.mxu0 %v126
    %v370 = vpop.f32.mrf.mxu0
    %v371 = vadd.f32 0.0, %v370
    %v372 = vpop.f32.mrf.mxu0
    %v373 = vadd.f32 0.0, %v372
    %374 = vdwg.mxu0
    %v375 = vmul.f32 %v329, 0.5
    %v376 = vmul.f32 %v343, 0.5
    %v377 = vmul.f32 %v331, 0.5
    %v378 = vmul.f32 %v345, 0.5
    %v379 = vtanh.pop %v375
    %v380 = vtanh.pop %v376
    %v381 = vtanh.pop %v377
    %v382 = vtanh.pop %v378
    %v383 = vadd.f32 %v379, 1.0
    %v384 = vadd.f32 %v380, 1.0
    %v385 = vadd.f32 %v381, 1.0
    %v386 = vadd.f32 %v382, 1.0
    %v387 = vmul.f32 %v375, %v383
    %v388 = vmul.f32 %v376, %v384
    %v389 = vmul.f32 %v377, %v385
    %v390 = vmul.f32 %v378, %v386
    %v391 = vmul.f32 %v387, %v357
    %v392 = vmul.f32 %v388, %v371
    %v393 = vmul.f32 %v389, %v359
    %v394 = vmul.f32 %v390, %v373
    %v395 = vpack.c.bf16 %v393, %v391
    %v396 = vpack.c.bf16 %v394, %v392
    %v397 = vld [vmem:[#allocation8] sm:$0xf]
    %v398 = vld [vmem:[#allocation8 + $0x4] sm:$0xf]
    %v399 = vld [vmem:[#allocation8 + $0x8] sm:$0xf]
    %v400 = vld [vmem:[#allocation8 + $0xc] sm:$0xf]
    %v401 = vld [vmem:[#allocation8 + $0x10] sm:$0xf]
    %v402 = vld [vmem:[#allocation8 + $0x14] sm:$0xf]
    %v403 = vld [vmem:[#allocation8 + $0x18] sm:$0xf]
    %v404 = vld [vmem:[#allocation8 + $0x1c] sm:$0xf]
    %v405 = vld [vmem:[#allocation8 + $0x20] sm:$0xf]
    %v406 = vld [vmem:[#allocation8 + $0x24] sm:$0xf]
    %v407 = vld [vmem:[#allocation8 + $0x28] sm:$0xf]
    %v408 = vld [vmem:[#allocation8 + $0x2c] sm:$0xf]
    %v409 = vld [vmem:[#allocation8 + $0x30] sm:$0xf]
    %v410 = vld [vmem:[#allocation8 + $0x34] sm:$0xf]
    %v411 = vld [vmem:[#allocation8 + $0x38] sm:$0xf]
    %v412 = vld [vmem:[#allocation8 + $0x3c] sm:$0xf]
    %v413 = vld [vmem:[#allocation8 + $0x40] sm:$0xf]
    %v414 = vld [vmem:[#allocation8 + $0x44] sm:$0xf]
    %v415 = vld [vmem:[#allocation8 + $0x48] sm:$0xf]
    %v416 = vld [vmem:[#allocation8 + $0x4c] sm:$0xf]
    %v417 = vld [vmem:[#allocation8 + $0x50] sm:$0xf]
    %v418 = vld [vmem:[#allocation8 + $0x54] sm:$0xf]
    %v419 = vld [vmem:[#allocation8 + $0x58] sm:$0xf]
    %v420 = vld [vmem:[#allocation8 + $0x5c] sm:$0xf]
    %v421 = vld [vmem:[#allocation8 + $0x60] sm:$0xf]
    %v422 = vld [vmem:[#allocation8 + $0x64] sm:$0xf]
    %v423 = vld [vmem:[#allocation8 + $0x68] sm:$0xf]
    %v424 = vld [vmem:[#allocation8 + $0x6c] sm:$0xf]
    %v425 = vld [vmem:[#allocation8 + $0x70] sm:$0xf]
    %v426 = vld [vmem:[#allocation8 + $0x74] sm:$0xf]
    %v427 = vld [vmem:[#allocation8 + $0x78] sm:$0xf]
    %v428 = vld [vmem:[#allocation8 + $0x7c] sm:$0xf]
    %v461 = vunpack.c.l.b16 %v397
    %v462 = vunpack.c.l.b16 %v398
    %v463 = vunpack.c.l.b16 %v399
    %v464 = vunpack.c.l.b16 %v400
    %v465 = vunpack.c.l.b16 %v401
    %v466 = vunpack.c.l.b16 %v402
    %v467 = vunpack.c.l.b16 %v403
    %v468 = vunpack.c.l.b16 %v404
    %v469 = vunpack.c.l.b16 %v405
    %v470 = vunpack.c.l.b16 %v406
    %v471 = vunpack.c.l.b16 %v407
    %v472 = vunpack.c.l.b16 %v408
    %v473 = vunpack.c.l.b16 %v409
    %v474 = vunpack.c.l.b16 %v410
    %v475 = vunpack.c.l.b16 %v411
    %v476 = vunpack.c.l.b16 %v412
    %v477 = vunpack.c.l.b16 %v413
    %v478 = vunpack.c.l.b16 %v414
    %v479 = vunpack.c.l.b16 %v415
    %v480 = vunpack.c.l.b16 %v416
    %v481 = vunpack.c.l.b16 %v417
    %v482 = vunpack.c.l.b16 %v418
    %v483 = vunpack.c.l.b16 %v419
    %v484 = vunpack.c.l.b16 %v420
    %v485 = vunpack.c.l.b16 %v421
    %v486 = vunpack.c.l.b16 %v422
    %v487 = vunpack.c.l.b16 %v423
    %v488 = vunpack.c.l.b16 %v424
    %v489 = vunpack.c.l.b16 %v425
    %v490 = vunpack.c.l.b16 %v426
    %v491 = vunpack.c.l.b16 %v427
    %v492 = vunpack.c.l.b16 %v428
    %v493 = vpack.c.b16 %v462, %v461
    %v494 = vpack.c.b16 %v464, %v463
    %v495 = vpack.c.b16 %v466, %v465
    %v496 = vpack.c.b16 %v468, %v467
    %v497 = vpack.c.b16 %v470, %v469
    %v498 = vpack.c.b16 %v472, %v471
    %v499 = vpack.c.b16 %v474, %v473
    %v500 = vpack.c.b16 %v476, %v475
    %v501 = vpack.c.b16 %v478, %v477
    %v502 = vpack.c.b16 %v480, %v479
    %v503 = vpack.c.b16 %v482, %v481
    %v504 = vpack.c.b16 %v484, %v483
    %v505 = vpack.c.b16 %v486, %v485
    %v506 = vpack.c.b16 %v488, %v487
    %v507 = vpack.c.b16 %v490, %v489
    %v508 = vpack.c.b16 %v492, %v491
    %525 = vmatpush.bf16.msra.mxu0 %v500
    %526 = vmatpush.bf16.msra.mxu0 %v499
    %527 = vmatpush.bf16.msra.mxu0 %v498
    %528 = vmatpush.bf16.msra.mxu0 %v497
    %529 = vmatpush.bf16.msra.mxu0 %v496
    %530 = vmatpush.bf16.msra.mxu0 %v495
    %531 = vmatpush.bf16.msra.mxu0 %v494
    %532 = vmatpush.bf16.msra.mxu0 %v493
    %533 = vmatmul.bf16.gmra.mxu0 %v395
    %v534 = vpop.f32.mrf.mxu0
    %v535 = vadd.f32 0.0, %v534
    %v536 = vpop.f32.mrf.mxu0
    %v537 = vadd.f32 0.0, %v536
    %538 = vdwg.mxu0
    %539 = vmatpush.bf16.msra.mxu0 %v508
    %540 = vmatpush.bf16.msra.mxu0 %v507
    %541 = vmatpush.bf16.msra.mxu0 %v506
    %542 = vmatpush.bf16.msra.mxu0 %v505
    %543 = vmatpush.bf16.msra.mxu0 %v504
    %544 = vmatpush.bf16.msra.mxu0 %v503
    %545 = vmatpush.bf16.msra.mxu0 %v502
    %546 = vmatpush.bf16.msra.mxu0 %v501
    %547 = vmatmul.bf16.gmra.mxu0 %v396
    %v548 = vpop.f32.mrf.mxu0
    %v549 = vadd.f32 %v535, %v548
    %v550 = vpop.f32.mrf.mxu0
    %v551 = vadd.f32 %v537, %v550
    %552 = vdwg.mxu0
    %553 = vst [vmem:[#allocation10] sm:$0xff] %v549
    %554 = vst [vmem:[#allocation10 + $0x8] sm:$0xff] %v551
    // Predicated region
    $region34: #{tpu_custom_call.1} parent=1 // pred_check
      _
    $region35: #{tpu_custom_call.1} parent=1 // pred_check_branch
      %556 = sbr.rel (0) target = $region37
    $region36: #{tpu_custom_call.1} parent=1 // pred_region
      %558 = vsyncadd [#allocation4], 0
      %s559 = sshll.u32 [#allocation10], 4
      %s560 = int_to_ptr.vmem [resolvable:$true] %s559
      %s561 = sshll.u32 %s4, 4
      %s562 = int_to_ptr.hbm [resolvable:$true] %s561
      %567 = dma.vmem_to_hbm [thread:$0]  %s560, 256, %s562, [#allocation4], 128, 128, 8
    $region37: #{tpu_custom_call.1} parent=1 // pred_fallthru
      _
    // Predicated region
    $region38: #{tpu_custom_call.1} parent=1 // pred_check
      _
    $region39: #{tpu_custom_call.1} parent=1 // pred_check_branch
      %569 = sbr.rel (0) target = $region41
    $region40: #{tpu_custom_call.1} parent=1 // pred_region
      %571 = dma.done [#allocation4], 256
    $region41: #{tpu_custom_call.1} parent=1 // pred_fallthru
      _
    %572 = vsyncpa [#allocation3], 1
    %573 = vsyncpa [#allocation6], 1
    %574 = vsyncpa [#allocation9], 1
    %575 = vsyncpa [#allocation4], 1

</llo_original>
